<compile_context>
chip_gen: v7x
topology: tpu7x:2x2x1
jax: 0.10.0
libtpu: 0.0.40
codegen_flags: <defaults>
</compile_context>

<pallas_src>
import functools

import jax
import jax.numpy as jnp
from jax.experimental import pallas as pl
from jax.experimental.pallas import tpu as pltpu


def _round_up(x, m):
    return ((x + m - 1) // m) * m


def _fpfn_ce_kernel(x_ref, t_ref, acc_ref, *, fn_weight, fp_weight, hw, th,
                    tps, total_tiles, guard_tail, mask_tail):
    """Grid: (batch, shard, tile).  acc_ref is an (8,128) resident accumulator."""
    j = pl.program_id(2)
    g = pl.program_id(1) * tps + j            # global pixel-tile index

    @pl.when(j == 0)
    def _():
        acc_ref[...] = jnp.zeros_like(acc_ref)

    def compute():
        t = t_ref[...]                        # (th, 128), native label dtype
        if t.dtype != jnp.int32:
            t = t.astype(jnp.int32)           # one cheap VPU cast, in VMEM
        num_classes = x_ref.shape[0]

        if num_classes == 2:
            # Binary fast path: CE = softplus(d) - d*[t==1],  d = x1 - x0,
            # pred = 1 iff x1 > x0 (ties -> class 0 == first-max argmax).
            x0 = x_ref[0].astype(jnp.float32)
            x1 = x_ref[1].astype(jnp.float32)
            d = x1 - x0
            t1 = t == 1
            t0 = t == 0
            ce = (jnp.maximum(d, 0.0) + jnp.log1p(jnp.exp(-jnp.abs(d)))
                  - jnp.where(t1, d, 0.0))
            pred1 = d > 0.0
            fn_f = jnp.where(t1 & jnp.logical_not(pred1), 1.0, 0.0)
            fp_f = jnp.where(t0 & pred1, 1.0, 0.0)
        else:
            # General path: unrolled per-channel loop — only a handful of
            # (th,128) f32 live buffers, no (C,th,128) temporaries.
            x0 = x_ref[0].astype(jnp.float32)
            m = x0                                          # running max
            pred = jnp.zeros(t.shape, jnp.int32)            # running argmax
            sel = jnp.where(t == 0, x0, 0.0)                # selected logit
            for cls in range(1, num_classes):
                xc = x_ref[cls].astype(jnp.float32)
                gt = xc > m                 # strict > keeps the first max
                m = jnp.where(gt, xc, m)
                pred = jnp.where(gt, cls, pred)
                sel = sel + jnp.where(t == cls, xc, 0.0)
            s = jnp.exp(x0 - m)
            for cls in range(1, num_classes):
                s = s + jnp.exp(x_ref[cls].astype(jnp.float32) - m)
            ce = jnp.log(s) + m - sel
            fn_f = jnp.where((pred == 0) & (t == 1), 1.0, 0.0)
            fp_f = jnp.where((pred == 1) & (t == 0), 1.0, 0.0)

        w = 1.0 + (fn_weight - 1.0) * fn_f + (fp_weight - 1.0) * fp_f

        if mask_tail:
            # Ragged H*W: zero the padded tail pixels (global index >= hw).
            rows_i = jax.lax.broadcasted_iota(jnp.int32, t.shape, 0)
            lane_i = jax.lax.broadcasted_iota(jnp.int32, t.shape, 1)
            pix = (g * th + rows_i) * 128 + lane_i
            w = jnp.where(pix < hw, w, 0.0)

        contrib = ce * w                                         # (th, 128)
        folded = contrib.reshape(th // 8, 8, 128).sum(axis=0)    # (8, 128)
        acc_ref[...] = acc_ref[...] + folded

    if guard_tail:
        @pl.when(g < total_tiles)
        def _():
            compute()
    else:
        compute()


def fpfn_penalized_ce_loss(outputs, targets, fn_weight=3.0, fp_weight=3.0,
                           tile_rows=1024, vmem_block_budget=8 * 1024 * 1024):
    """outputs: (N, C, H, W) float logits; targets: (N, H, W) integer labels."""
    n, c, h, w = outputs.shape
    hw = h * w
    p = n * hw                                   # true pixel count for the mean

    logit_bytes = outputs.dtype.itemsize
    tgt_bytes = targets.dtype.itemsize

    rows_raw = pl.cdiv(hw, 128)
    # Sublane granularity: 32 keeps sub-32-bit label dtypes on native packing;
    # tiny inputs fall back to 8 (block then spans the full rows axis).
    base = 32 if rows_raw >= 32 else 8
    rows_min = _round_up(rows_raw, base)

    # VMEM-aware tile cap: 2x (double-buffered) input blocks + ~8 f32 temps.
    bytes_per_row = 2 * 128 * (c * logit_bytes + tgt_bytes) + 8 * 128 * 4
    th_cap = max(base, (int(vmem_block_budget) // bytes_per_row) // base * base)
    th_cap = min(th_cap, max(base, (int(tile_rows) // base) * base))

    th = min(rows_min, th_cap)
    rows = pl.cdiv(rows_raw, th) * th
    hw_pad = rows * 128
    ragged = hw_pad != hw

    # Free reshapes into a lane-dense pixel layout (no transpose, no upcast).
    logits = outputs.reshape(n, c, hw)
    tgt = targets.reshape(n, hw)                 # native dtype, no astype copy
    if ragged:
        # Rare path (H*W not a multiple of 128).  Zero padding keeps every
        # value finite; the kernel zeroes padded pixels' weight by index.
        logits = jnp.pad(logits, ((0, 0), (0, 0), (0, hw_pad - hw)))
        tgt = jnp.pad(tgt, ((0, 0), (0, hw_pad - hw)))
    logits = logits.reshape(n, c, rows, 128)
    tgt = tgt.reshape(n, rows, 128)

    total_tiles = rows // th
    # Unconditional 2-way pixel-shard split whenever >1 tile (feeds both
    # TensorCores on v7x together with the parallel batch axis).
    shards = 2 if total_tiles >= 2 else 1
    tps = pl.cdiv(total_tiles, shards)
    guard_tail = shards * tps != total_tiles

    if guard_tail:
        def tile_idx(s, j):
            return jnp.minimum(s * tps + j, total_tiles - 1)
    else:
        def tile_idx(s, j):
            return s * tps + j

    kernel = functools.partial(
        _fpfn_ce_kernel,
        fn_weight=float(fn_weight), fp_weight=float(fp_weight),
        hw=hw, th=th, tps=tps, total_tiles=total_tiles,
        guard_tail=guard_tail, mask_tail=ragged)

    partial_sums = pl.pallas_call(
        kernel,
        out_shape=jax.ShapeDtypeStruct((n, shards, 8, 128), jnp.float32),
        grid_spec=pltpu.PrefetchScalarGridSpec(
            num_scalar_prefetch=0,
            grid=(n, shards, tps),
            in_specs=[
                # logits: (N, C, rows, 128) -> kernel block (C, th, 128)
                pl.BlockSpec((None, c, th, 128),
                             lambda b, s, j: (b, 0, tile_idx(s, j), 0)),
                # targets: (N, rows, 128) -> kernel block (th, 128)
                pl.BlockSpec((None, th, 128),
                             lambda b, s, j: (b, tile_idx(s, j), 0)),
            ],
            # Per-(batch, shard) folded accumulator, resident across j.
            out_specs=pl.BlockSpec((None, None, 8, 128),
                                   lambda b, s, j: (b, s, 0, 0)),
        ),
        compiler_params=pltpu.CompilerParams(
            dimension_semantics=("parallel", "parallel", "arbitrary"),
            vmem_limit_bytes=32 * 1024 * 1024),
    )(logits, tgt)

    return jnp.sum(partial_sums) / jnp.float32(p)


def _reference_loss(outputs, targets, fn_weight=3.0, fp_weight=3.0):
    """Plain-JAX reference mirroring the PyTorch module."""
    logp = jax.nn.log_softmax(outputs.astype(jnp.float32), axis=1)
    t32 = targets.astype(jnp.int32)
    ce = -jnp.take_along_axis(logp, t32[:, None, :, :], axis=1)[:, 0]
    preds = jnp.argmax(outputs, axis=1).astype(jnp.int32)
    fn_mask = (preds == 0) & (t32 == 1)
    fp_mask = (preds == 1) & (t32 == 0)
    scale = jnp.where(fn_mask, fn_weight, jnp.where(fp_mask, fp_weight, 1.0))
    return jnp.mean(ce * scale)


if __name__ == "__main__":
    key = jax.random.PRNGKey(0)
    k = jax.random.split(key, 10)

    # Case 1: binary segmentation (the module's intended use), small & aligned.
    N, C, H, W = 2, 2, 16, 16
    outputs = jax.random.normal(k[0], (N, C, H, W), dtype=jnp.float32)
    targets = jax.random.randint(k[1], (N, H, W), 0, C, dtype=jnp.int32)
    loss = jax.block_until_ready(fpfn_penalized_ce_loss(outputs, targets))
    ref = _reference_loss(outputs, targets)
    assert jnp.allclose(loss, ref, rtol=1e-5, atol=1e-5), (loss, ref)

    # Case 2: multi-class path (per-channel loop) + non-default weights.
    N, C, H, W = 2, 4, 32, 48
    outputs = jax.random.normal(k[2], (N, C, H, W), dtype=jnp.float32)
    targets = jax.random.randint(k[3], (N, H, W), 0, C, dtype=jnp.int32)
    loss = jax.block_until_ready(
        fpfn_penalized_ce_loss(outputs, targets, fn_weight=2.5, fp_weight=1.5))
    ref = _reference_loss(outputs, targets, fn_weight=2.5, fp_weight=1.5)
    assert jnp.allclose(loss, ref, rtol=1e-5, atol=1e-5), (loss, ref)

    # Case 3: H*W not a multiple of 128 -> padded + in-kernel tail mask.
    N, C, H, W = 1, 3, 10, 12
    outputs = jax.random.normal(k[4], (N, C, H, W), dtype=jnp.float32)
    targets = jax.random.randint(k[5], (N, H, W), 0, C, dtype=jnp.int32)
    loss = jax.block_until_ready(fpfn_penalized_ce_loss(outputs, targets))
    ref = _reference_loss(outputs, targets)
    assert jnp.allclose(loss, ref, rtol=1e-5, atol=1e-5), (loss, ref)

    # Case 4: bf16 logits, odd tile count -> 2-way shard split with pl.when
    # guard + clamped index_map (tile_rows forced small to exercise it).
    N, C, H, W = 1, 2, 48, 64
    outputs = jax.random.normal(k[6], (N, C, H, W)).astype(jnp.bfloat16)
    targets = jax.random.randint(k[7], (N, H, W), 0, C, dtype=jnp.int32)
    loss = jax.block_until_ready(
        fpfn_penalized_ce_loss(outputs, targets, tile_rows=8))
    ref = _reference_loss(outputs, targets)
    assert jnp.allclose(loss, ref, rtol=1e-5, atol=1e-5), (loss, ref)

    # Case 5: uint8 labels read in their native dtype (no wrapper astype copy).
    N, C, H, W = 1, 2, 64, 64
    outputs = jax.random.normal(k[8], (N, C, H, W), dtype=jnp.float32)
    targets = jax.random.randint(k[9], (N, H, W), 0, C, dtype=jnp.int32)
    targets = targets.astype(jnp.uint8)
    loss = jax.block_until_ready(fpfn_penalized_ce_loss(outputs, targets))
    ref = _reference_loss(outputs, targets)
    assert jnp.allclose(loss, ref, rtol=1e-5, atol=1e-5), (loss, ref)

    print("KERNEL_OK")
</pallas_src>

<mosaic_0001>
module attributes {stable_mosaic.version = 11 : i64} {
  func.func @_fpfn_ce_kernel(%arg0: i32, %arg1: i32, %arg2: i32, %arg3: memref<1x2x8x128xf32, #tpu.memory_space<vmem>>, %arg4: memref<1x8x128xi32, #tpu.memory_space<vmem>>, %arg5: memref<1x1x8x128xf32, #tpu.memory_space<vmem>>) attributes {dimension_semantics = [#tpu.dimension_semantics<parallel>, #tpu.dimension_semantics<parallel>, #tpu.dimension_semantics<arbitrary>], iteration_bounds = array<i64: 2, 1, 1>, scalar_prefetch = 0 : i64, scratch_operands = 0 : i64, tpu.core_type = #tpu.core_type<tc>, window_params = [{transform_indices = @transform_0, window_bounds = array<i64: 1, 2, 8, 128>}, {transform_indices = @transform_1, window_bounds = array<i64: 1, 8, 128>}, {transform_indices = @transform_2, window_bounds = array<i64: 1, 1, 8, 128>}]} {
    %c1_i32 = arith.constant 1 : i32
    %0 = arith.muli %arg1, %c1_i32 : i32
    %1 = arith.addi %0, %arg2 : i32
    %c0_i32 = arith.constant 0 : i32
    %2 = arith.cmpi eq, %arg2, %c0_i32 : i32
    %3 = arith.extui %2 : i1 to i32
    %c0_i32_0 = arith.constant 0 : i32
    %4 = arith.cmpi ne, %3, %c0_i32_0 : i32
    scf.if %4 {
      %cst_33 = arith.constant 0.000000e+00 : f32
      %66 = vector.broadcast %cst_33 : f32 to vector<8x128xf32>
      %c0_34 = arith.constant 0 : index
      %c0_35 = arith.constant 0 : index
      %c0_36 = arith.constant 0 : index
      %c0_37 = arith.constant 0 : index
      %67 = vector.load %arg5[%c0_34, %c0_35, %c0_36, %c0_37] : memref<1x1x8x128xf32, #tpu.memory_space<vmem>>, vector<1x1x8x128xf32>
      %68 = vector.shape_cast %67 : vector<1x1x8x128xf32> to vector<8x128xf32>
      %69 = vector.shape_cast %66 : vector<8x128xf32> to vector<1x1x8x128xf32>
      tpu.vector_store %arg5[%c0_34, %c0_35, %c0_36, %c0_37], %69 {strides = array<i32>} : memref<1x1x8x128xf32, #tpu.memory_space<vmem>>, vector<1x1x8x128xf32>,
    } else {
    }
    %c0 = arith.constant 0 : index
    %c0_1 = arith.constant 0 : index
    %c0_2 = arith.constant 0 : index
    %5 = vector.load %arg4[%c0, %c0_1, %c0_2] : memref<1x8x128xi32, #tpu.memory_space<vmem>>, vector<1x8x128xi32>
    %6 = vector.shape_cast %5 : vector<1x8x128xi32> to vector<8x128xi32>
    %c0_3 = arith.constant 0 : index
    %c0_4 = arith.constant 0 : index
    %c0_5 = arith.constant 0 : index
    %c0_6 = arith.constant 0 : index
    %7 = vector.load %arg3[%c0_3, %c0_4, %c0_5, %c0_6] : memref<1x2x8x128xf32, #tpu.memory_space<vmem>>, vector<1x1x8x128xf32>
    %8 = vector.shape_cast %7 : vector<1x1x8x128xf32> to vector<8x128xf32>
    %c0_7 = arith.constant 0 : index
    %c1 = arith.constant 1 : index
    %c0_8 = arith.constant 0 : index
    %c0_9 = arith.constant 0 : index
    %9 = vector.load %arg3[%c0_7, %c1, %c0_8, %c0_9] : memref<1x2x8x128xf32, #tpu.memory_space<vmem>>, vector<1x1x8x128xf32>
    %10 = vector.shape_cast %9 : vector<1x1x8x128xf32> to vector<8x128xf32>
    %11 = arith.subf %10, %8 : vector<8x128xf32>
    %c1_i32_10 = arith.constant 1 : i32
    %12 = vector.broadcast %c1_i32_10 : i32 to vector<8x128xi32>
    %13 = arith.cmpi eq, %6, %12 : vector<8x128xi32>
    %c0_i32_11 = arith.constant 0 : i32
    %14 = vector.broadcast %c0_i32_11 : i32 to vector<8x128xi32>
    %15 = arith.cmpi eq, %6, %14 : vector<8x128xi32>
    %cst = arith.constant 0.000000e+00 : f32
    %16 = vector.broadcast %cst : f32 to vector<8x128xf32>
    %17 = arith.maximumf %11, %16 : vector<8x128xf32>
    %18 = math.absf %11 : vector<8x128xf32>
    %cst_12 = arith.constant 0.000000e+00 : f32
    %19 = vector.broadcast %cst_12 : f32 to vector<8x128xf32>
    %20 = arith.subf %19, %18 : vector<8x128xf32>
    %21 = math.exp %20 : vector<8x128xf32>
    %22 = math.log1p %21 : vector<8x128xf32>
    %23 = arith.addf %17, %22 : vector<8x128xf32>
    %cst_13 = arith.constant 0.000000e+00 : f32
    %24 = vector.broadcast %cst_13 : f32 to vector<8x128xf32>
    %25 = arith.select %13, %11, %24 : vector<8x128xi1>, vector<8x128xf32>
    %26 = arith.subf %23, %25 : vector<8x128xf32>
    %cst_14 = arith.constant 0.000000e+00 : f32
    %27 = vector.broadcast %cst_14 : f32 to vector<8x128xf32>
    %28 = arith.cmpf ogt, %11, %27 : vector<8x128xf32>
    %cst_15 = arith.constant dense<true> : vector<8x128xi1>
    %29 = arith.xori %28, %cst_15 : vector<8x128xi1>
    %30 = arith.andi %13, %29 : vector<8x128xi1>
    %cst_16 = arith.constant 1.000000e+00 : f32
    %cst_17 = arith.constant 0.000000e+00 : f32
    %31 = vector.broadcast %cst_16 : f32 to vector<8x128xf32>
    %32 = vector.broadcast %cst_17 : f32 to vector<8x128xf32>
    %33 = arith.select %30, %31, %32 : vector<8x128xi1>, vector<8x128xf32>
    %34 = arith.andi %15, %28 : vector<8x128xi1>
    %cst_18 = arith.constant 1.000000e+00 : f32
    %cst_19 = arith.constant 0.000000e+00 : f32
    %35 = vector.broadcast %cst_18 : f32 to vector<8x128xf32>
    %36 = vector.broadcast %cst_19 : f32 to vector<8x128xf32>
    %37 = arith.select %34, %35, %36 : vector<8x128xi1>, vector<8x128xf32>
    %cst_20 = arith.constant 2.000000e+00 : f32
    %38 = vector.broadcast %cst_20 : f32 to vector<8x128xf32>
    %39 = arith.mulf %38, %33 : vector<8x128xf32>
    %cst_21 = arith.constant 1.000000e+00 : f32
    %40 = vector.broadcast %cst_21 : f32 to vector<8x128xf32>
    %41 = arith.addf %40, %39 : vector<8x128xf32>
    %cst_22 = arith.constant 2.000000e+00 : f32
    %42 = vector.broadcast %cst_22 : f32 to vector<8x128xf32>
    %43 = arith.mulf %42, %37 : vector<8x128xf32>
    %44 = arith.addf %41, %43 : vector<8x128xf32>
    %45 = tpu.iota {dimensions = array<i32: 0>} : vector<8x128xi32>
    %46 = tpu.iota {dimensions = array<i32: 1>} : vector<8x128xi32>
    %c8_i32 = arith.constant 8 : i32
    %47 = arith.muli %1, %c8_i32 : i32
    %48 = vector.broadcast %47 : i32 to vector<8x128xi32>
    %49 = arith.addi %48, %45 : vector<8x128xi32>
    %c128_i32 = arith.constant 128 : i32
    %50 = vector.broadcast %c128_i32 : i32 to vector<8x128xi32>
    %51 = arith.muli %49, %50 : vector<8x128xi32>
    %52 = arith.addi %51, %46 : vector<8x128xi32>
    %c256_i32 = arith.constant 256 : i32
    %53 = vector.broadcast %c256_i32 : i32 to vector<8x128xi32>
    %54 = arith.cmpi slt, %52, %53 : vector<8x128xi32>
    %cst_23 = arith.constant 0.000000e+00 : f32
    %55 = vector.broadcast %cst_23 : f32 to vector<8x128xf32>
    %56 = arith.select %54, %44, %55 : vector<8x128xi1>, vector<8x128xf32>
    %57 = arith.mulf %26, %56 : vector<8x128xf32>
    %58 = vector.shape_cast %57 : vector<8x128xf32> to vector<1x8x128xf32>
    %cst_24 = arith.constant dense<0.000000e+00> : vector<8x128xf32>
    %59 = vector.multi_reduction <add>, %58, %cst_24 [0] : vector<1x8x128xf32> to vector<8x128xf32>
    %c0_25 = arith.constant 0 : index
    %c0_26 = arith.constant 0 : index
    %c0_27 = arith.constant 0 : index
    %c0_28 = arith.constant 0 : index
    %60 = vector.load %arg5[%c0_25, %c0_26, %c0_27, %c0_28] : memref<1x1x8x128xf32, #tpu.memory_space<vmem>>, vector<1x1x8x128xf32>
    %61 = vector.shape_cast %60 : vector<1x1x8x128xf32> to vector<8x128xf32>
    %62 = arith.addf %61, %59 : vector<8x128xf32>
    %c0_29 = arith.constant 0 : index
    %c0_30 = arith.constant 0 : index
    %c0_31 = arith.constant 0 : index
    %c0_32 = arith.constant 0 : index
    %63 = vector.load %arg5[%c0_29, %c0_30, %c0_31, %c0_32] : memref<1x1x8x128xf32, #tpu.memory_space<vmem>>, vector<1x1x8x128xf32>
    %64 = vector.shape_cast %63 : vector<1x1x8x128xf32> to vector<8x128xf32>
    %65 = vector.shape_cast %62 : vector<8x128xf32> to vector<1x1x8x128xf32>
    tpu.vector_store %arg5[%c0_29, %c0_30, %c0_31, %c0_32], %65 {strides = array<i32>} : memref<1x1x8x128xf32, #tpu.memory_space<vmem>>, vector<1x1x8x128xf32>,
    return
  }
  func.func @transform_0(%arg0: i32, %arg1: i32, %arg2: i32) -> (i32, i32, i32, i32) {
    %c1_i32 = arith.constant 1 : i32
    %0 = arith.muli %arg1, %c1_i32 : i32
    %1 = arith.addi %0, %arg2 : i32
    %c0_i32 = arith.constant 0 : i32
    %c0_i32_0 = arith.constant 0 : i32
    %c0_i32_1 = arith.constant 0 : i32
    return %arg0, %c0_i32, %1, %c0_i32_0 : i32, i32, i32, i32
  }
  func.func @transform_1(%arg0: i32, %arg1: i32, %arg2: i32) -> (i32, i32, i32) {
    %c1_i32 = arith.constant 1 : i32
    %0 = arith.muli %arg1, %c1_i32 : i32
    %1 = arith.addi %0, %arg2 : i32
    %c0_i32 = arith.constant 0 : i32
    %c0_i32_0 = arith.constant 0 : i32
    return %arg0, %1, %c0_i32 : i32, i32, i32
  }
  func.func @transform_2(%arg0: i32, %arg1: i32, %arg2: i32) -> (i32, i32, i32, i32) {
    %c0_i32 = arith.constant 0 : i32
    %c0_i32_0 = arith.constant 0 : i32
    %c0_i32_1 = arith.constant 0 : i32
    return %arg0, %arg1, %c0_i32, %c0_i32_0 : i32, i32, i32, i32
  }
}

</mosaic_0001>

<llo_original>
// kernel: tpu_custom_call.1
$region0: #{tpu_custom_call.1}
  #allocation0 [shape = 'u32[]', space=smem, size = 0x4, offset = 0x4, fixed_abs, tag = 'smem constant byte address 0x4 - core index']
  #allocation1 [shape = 'u32[144,128]{1,0:T(1,128)}', space=vmem, size = 0x12000, scoped, tag = 'internal scratch']
  %s0 = inlined_call_operand.hbm [shape: f32[2,2,8,128], index: 0, kind: input, shape index: {}]
  %s1 = inlined_call_operand.hbm [shape: s32[2,8,128], index: 1, kind: input, shape index: {}]
  %s2 = inlined_call_operand.hbm [shape: f32[2,1,8,128], index: 2, kind: output, shape index: {}]
  %s3 = sld [smem:[#allocation0]]
  $region53: #{tpu_custom_call.1} parent=0
    _
  %s5 = ssub.s32 1, %s3
  %s6 = scalar_select 0, %s5, %s3
  $region1: #{tpu_custom_call.1} parent=0
    #allocation2 [shape = 'u8[16384]{0}', space=vmem, size = 0x4000, scoped, tag = 'input window, operand 0']
    #allocation3 [shape = 's32[2]{0}', space=sflag, size = 0x8, scoped, tag = 'scoped memory for tpu_custom_call.1']
    #allocation4 [shape = 's32[2]{0}', space=sflag, size = 0x8, scoped, tag = 'scoped memory for tpu_custom_call.1']
    #allocation5 [shape = 'u8[8192]{0}', space=vmem, size = 0x2000, scoped, tag = 'input window, operand 1']
    #allocation6 [shape = 's32[2]{0}', space=sflag, size = 0x8, scoped, tag = 'scoped memory for tpu_custom_call.1']
    #allocation7 [shape = 'u8[8192]{0}', space=vmem, size = 0x2000, scoped, tag = 'output window, operand 0']
    %7 = vsyncpa [#allocation3], 0
    %s8 = scalar_lea.sflag [#allocation3], 1
    %9 = vsyncpa %s8, 0
    %10 = vsyncpa [#allocation6], 0
    %s11 = scalar_lea.sflag [#allocation6], 1
    %12 = vsyncpa %s11, 0
    %13 = vsyncpa [#allocation4], 0
    %s14 = scalar_lea.sflag [#allocation4], 1
    %15 = vsyncpa %s14, 0
    loop: start=0, step=1, limit=4
    $region2: #{tpu_custom_call.1} parent=1 // loop_pre_header
      _
    $region3: #{tpu_custom_call.1} parent=1 // loop_header
      %s17 = sphi 0, %s21
      %p18 = scmp.ge.s32.totalorder %s17, 4
      %s24 = sphi 0, %s43
      %s25 = sphi 0, %s39
      %s26 = sphi 0, %s35
      %s27 = sphi 0, %s24
      %s28 = sphi 0, %s25
      %s29 = sphi 0, %s26
      %s30 = sphi 0, %s27
      %s31 = sphi 0, %s28
      %s32 = sphi 0, %s29
      %s50 = sphi 0, %s52
      %s53 = sphi 0, %s50
      %s54 = sphi 0, %s53
      %s70 = sphi 0, %s54
      %s80 = sphi 0, %s82
      %s83 = sphi 0, %s80
      %s84 = sphi 0, %s83
      %s100 = sphi 0, %s84
      %s108 = sphi 0, %s110
      %s111 = sphi 0, %s108
      %s112 = sphi 0, %s111
      %s128 = sphi 0, %s112
    $region4: #{tpu_custom_call.1} parent=1 // loop_header_branch
      %20 = sbr.rel (%p18) target = $region8
    $region5: #{tpu_custom_call.1} parent=1 // loop_body
      %s22 = ssub.s32 %s17, 1
      %s23 = ssub.s32 %s17, 2
      %s33 = sadd.s32 1, %s26
      %p34 = scmp.ge.s32.totalorder %s33, 1
      %s35 = scalar_select %p34, 0, %s33
      %s36 = sadd.s32 1, %s25
      %s37 = scalar_select %p34, %s36, %s25
      %p38 = scmp.ge.s32.totalorder %s37, 1
      %s39 = scalar_select %p38, 0, %s37
      %s40 = sadd.s32 1, %s24
      %s41 = scalar_select %p38, %s40, %s24
      %p42 = scmp.ge.s32.totalorder %s41, 2
      %s43 = scalar_select %p42, 0, %s41
      %s44 = sadd.s32 %s25, %s26
      %s45 = sadd.s32 %s39, %s35
      %s46 = ssub.s32 %s24, %s43
      %s47 = ssub.s32 %s44, %s45
      %s48 = sor.u32 %s46, %s47
      %p49 = scmp.eq.s32.totalorder %s48, 0
      %s51 = sadd.s32 %s50, 1
      %s52 = scalar_select %p49, %s50, %s51
      %p55 = pneg %p49
      %p56 = scmp.eq.s32.totalorder %s17, 1
      %p57 = por %p55, %p56
      %p58 = scmp.ne.s32.totalorder %s50, %s53
      %p59 = scmp.eq.s32.totalorder %s17, 0
      %p60 = por %p58, %p59
      %p61 = scmp.ne.s32.totalorder %s50, %s53
      %p62 = scmp.eq.s32.totalorder %s22, 1
      %p63 = por %p61, %p62
      %p64 = scmp.ne.s32.totalorder %s53, %s54
      %p65 = scmp.eq.s32.totalorder %s22, 0
      %p66 = por %p64, %p65
      %p67 = scmp.ne.s32.totalorder %s53, %s54
      %p68 = scmp.eq.s32.totalorder %s23, 1
      %p69 = por %p67, %p68
      %p71 = scmp.ne.s32.totalorder %s54, %s70
      %p72 = scmp.eq.s32.totalorder %s23, 0
      %p73 = por %p71, %p72
      %s74 = sadd.s32 %s25, %s26
      %s75 = sadd.s32 %s39, %s35
      %s76 = ssub.s32 %s24, %s43
      %s77 = ssub.s32 %s74, %s75
      %s78 = sor.u32 %s76, %s77
      %p79 = scmp.eq.s32.totalorder %s78, 0
      %s81 = sadd.s32 %s80, 1
      %s82 = scalar_select %p79, %s80, %s81
      %p85 = pneg %p79
      %p86 = scmp.eq.s32.totalorder %s17, 1
      %p87 = por %p85, %p86
      %p88 = scmp.ne.s32.totalorder %s80, %s83
      %p89 = scmp.eq.s32.totalorder %s17, 0
      %p90 = por %p88, %p89
      %p91 = scmp.ne.s32.totalorder %s80, %s83
      %p92 = scmp.eq.s32.totalorder %s22, 1
      %p93 = por %p91, %p92
      %p94 = scmp.ne.s32.totalorder %s83, %s84
      %p95 = scmp.eq.s32.totalorder %s22, 0
      %p96 = por %p94, %p95
      %p97 = scmp.ne.s32.totalorder %s83, %s84
      %p98 = scmp.eq.s32.totalorder %s23, 1
      %p99 = por %p97, %p98
      %p101 = scmp.ne.s32.totalorder %s84, %s100
      %p102 = scmp.eq.s32.totalorder %s23, 0
      %p103 = por %p101, %p102
      %s104 = ssub.s32 %s24, %s43
      %s105 = ssub.s32 %s25, %s39
      %s106 = sor.u32 %s104, %s105
      %p107 = scmp.eq.s32.totalorder %s106, 0
      %s109 = sadd.s32 %s108, 1
      %s110 = scalar_select %p107, %s108, %s109
      %p113 = pneg %p107
      %p114 = scmp.eq.s32.totalorder %s17, 1
      %p115 = por %p113, %p114
      %p116 = scmp.ne.s32.totalorder %s108, %s111
      %p117 = scmp.eq.s32.totalorder %s17, 0
      %p118 = por %p116, %p117
      %p119 = scmp.ne.s32.totalorder %s108, %s111
      %p120 = scmp.eq.s32.totalorder %s22, 1
      %p121 = por %p119, %p120
      %p122 = scmp.ne.s32.totalorder %s111, %s112
      %p123 = scmp.eq.s32.totalorder %s22, 0
      %p124 = por %p122, %p123
      %p125 = scmp.ne.s32.totalorder %s111, %s112
      %p126 = scmp.eq.s32.totalorder %s23, 1
      %p127 = por %p125, %p126
      %p129 = scmp.ne.s32.totalorder %s112, %s128
      %p130 = scmp.eq.s32.totalorder %s23, 0
      %p131 = por %p129, %p130
      %p132 = scmp.le.s32.totalorder 1, %s17
      %p133 = scmp.lt.s32.totalorder %s17, 3
      %p134 = pnand %p132, %p133
      %p135 = pneg %p134
      // Predicated region
      $region9: #{tpu_custom_call.1} parent=5 // pred_check
        _
      $region10: #{tpu_custom_call.1} parent=5 // pred_check_branch
        %137 = sbr.rel (%p134) target = $region12
      $region11: #{tpu_custom_call.1} parent=5 // pred_region
        %s138 = ssub.s32 %s17, 1
      $region12: #{tpu_custom_call.1} parent=5 // pred_fallthru
        _
      %p139 = scmp.lt.s32.totalorder %s17, 2
      // Predicated region
      $region13: #{tpu_custom_call.1} parent=5 // pred_check
        %p140 = pneg %p139
      $region14: #{tpu_custom_call.1} parent=5 // pred_check_branch
        %142 = sbr.rel (%p140) target = $region16
      $region15: #{tpu_custom_call.1} parent=5 // pred_region
        // Predicated region
        $region17: #{tpu_custom_call.1} parent=15 // pred_check
          %p143 = pneg %p60
        $region18: #{tpu_custom_call.1} parent=15 // pred_check_branch
          %145 = sbr.rel (%p143) target = $region20
        $region19: #{tpu_custom_call.1} parent=15 // pred_region
          %s146 = sand.u32 %s50, 1
          %s147 = scalar_lea.sflag [#allocation3], %s146
          %s148 = sand.u32 %s50, 1
          %s149 = smul.addr %s148, 16
          %s150 = scalar_lea.vmem [#allocation2], %s149
          %s151 = sadd.s32 %s25, %s26
          %s153 = ssub.s32 256, 256
          %154 = vsyncadd %s147, %s153
          %s155 = smul.addr %s24, 2
          %s156 = sadd.s32 %s151, %s155
          %s157 = smul.addr %s156, 128
          %s158 = scalar_lea.hbm %s0, %s157
          %s159 = sshll.u32 %s150, 4
          %s160 = int_to_ptr.vmem [resolvable:$true] %s159
          %165 = dma.hbm_to_vmem [thread:$0]  %s158, 256, %s160, %s147, 128, 128, 8
        $region20: #{tpu_custom_call.1} parent=15 // pred_fallthru
          _
        // Predicated region
        $region21: #{tpu_custom_call.1} parent=15 // pred_check
          %p166 = pneg %p90
        $region22: #{tpu_custom_call.1} parent=15 // pred_check_branch
          %168 = sbr.rel (%p166) target = $region24
        $region23: #{tpu_custom_call.1} parent=15 // pred_region
          %s169 = sand.u32 %s80, 1
          %s170 = scalar_lea.sflag [#allocation6], %s169
          %s171 = sand.u32 %s80, 1
          %s172 = smul.addr %s171, 8
          %s173 = scalar_lea.vmem [#allocation5], %s172
          %s174 = sadd.s32 %s25, %s26
          %s176 = ssub.s32 128, 128
          %177 = vsyncadd %s170, %s176
          %s178 = sadd.s32 %s174, %s24
          %s179 = smul.addr %s178, 128
          %s180 = scalar_lea.hbm %s1, %s179
          %s182 = sshll.u32 %s173, 4
          %s183 = int_to_ptr.vmem [resolvable:$true] %s182
          %185 = dma.hbm_to_vmem [thread:$0]  %s180, 128, %s183, %s170
        $region24: #{tpu_custom_call.1} parent=15 // pred_fallthru
          _
      $region16: #{tpu_custom_call.1} parent=5 // pred_fallthru
        _
      %p186 = scmp.le.s32.totalorder 1, %s17
      %p187 = scmp.lt.s32.totalorder %s17, 3
      %p188 = pnand %p186, %p187
      %p189 = pneg %p188
      // Predicated region
      $region25: #{tpu_custom_call.1} parent=5 // pred_check
        _
      $region26: #{tpu_custom_call.1} parent=5 // pred_check_branch
        %191 = sbr.rel (%p188) target = $region28
      $region27: #{tpu_custom_call.1} parent=5 // pred_region
        %s192 = ssub.s32 %s17, 1
        %s193 = sand.u32 %s53, 1
        %s194 = scalar_lea.sflag [#allocation3], %s193
        %s195 = sand.u32 %s53, 1
        %s196 = smul.addr %s195, 16
        %s197 = scalar_lea.vmem [#allocation2], %s196
        // Predicated region
        $region29: #{tpu_custom_call.1} parent=27 // pred_check
          %p198 = pneg %p66
        $region30: #{tpu_custom_call.1} parent=27 // pred_check_branch
          %200 = sbr.rel (%p198) target = $region32
        $region31: #{tpu_custom_call.1} parent=27 // pred_region
          %201 = dma.done %s194, 256
        $region32: #{tpu_custom_call.1} parent=27 // pred_fallthru
          _
        %s202 = sand.u32 %s83, 1
        %s203 = scalar_lea.sflag [#allocation6], %s202
        %s204 = sand.u32 %s83, 1
        %s205 = smul.addr %s204, 8
        %s206 = scalar_lea.vmem [#allocation5], %s205
        // Predicated region
        $region33: #{tpu_custom_call.1} parent=27 // pred_check
          %p207 = pneg %p96
        $region34: #{tpu_custom_call.1} parent=27 // pred_check_branch
          %209 = sbr.rel (%p207) target = $region36
        $region35: #{tpu_custom_call.1} parent=27 // pred_region
          %210 = dma.done %s203, 128
        $region36: #{tpu_custom_call.1} parent=27 // pred_fallthru
          _
        %s211 = sand.u32 %s53, 1
        %s212 = scalar_lea.sflag [#allocation3], %s211
        %s213 = sand.u32 %s53, 1
        %s214 = smul.addr %s213, 16
        %s215 = scalar_lea.vmem [#allocation2], %s214
        %p216 = pneg %p66
        %p217 = pneg %p63
        %s218 = sand.u32 %s83, 1
        %s219 = scalar_lea.sflag [#allocation6], %s218
        %s220 = sand.u32 %s83, 1
        %s221 = smul.addr %s220, 8
        %s222 = scalar_lea.vmem [#allocation5], %s221
        %p223 = pneg %p96
        %p224 = pneg %p93
        %p225 = pneg %p124
        %p226 = pneg %p121
        %s227 = sand.u32 %s111, 1
        %s228 = scalar_lea.sflag [#allocation4], %s227
        %s229 = sand.u32 %s111, 1
        %s230 = smul.addr %s229, 8
        %s231 = scalar_lea.vmem [#allocation7], %s230
        %s232 = sadd.s32 %s28, %s29
        %s233 = sadd.s32 %s28, %s29
        %s234 = sadd.s32 %s28, %s29
        %p235 = scmp.eq.s32.totalorder %s29, 0
        // Predicated region
        $region37: #{tpu_custom_call.1} parent=27 // pred_check
          %p236 = pneg %p235
        $region38: #{tpu_custom_call.1} parent=27 // pred_check_branch
          %238 = sbr.rel (%p236) target = $region40
        $region39: #{tpu_custom_call.1} parent=27 // pred_region
          %239 = vst [vmem:[%s231] sm:$0xff] 0.0
        $region40: #{tpu_custom_call.1} parent=27 // pred_fallthru
          _
        %v240 = vld [vmem:[%s206] sm:$0xff]
        %v241 = vld [vmem:[%s197] sm:$0xff]
        %s242 = scalar_lea.vmem %s197, 8 [#allocation2]
        %v243 = vld [vmem:[%s242] sm:$0xff]
        %v244 = vsub.f32 %v243, %v241
        %vm245 = vcmp.eq.s32.totalorder %v240, 1
        %vm246 = vcmp.eq.s32.totalorder %v240, 0
        %v247 = vmax.f32 %v244, 0.0
        %v248 = vand.u32 2147483647, %v244
        %v249 = vsub.f32 0.0, %v248
        %v250 = vmul.f32 %v249, 1.442695
        %v251 = vpow.pop %v250
        %v252 = vadd.f32 %v251, 1.0
        %v253 = vlog2.pop %v252
        %v254 = vmul.f32 %v253, 0.6931472
        %v255 = vmul.f32 -0.5, %v251
        %v256 = vadd.f32 %v255, 1.0
        %v257 = vmul.f32 %v256, %v251
        %v258 = vand.u32 2147483647, %v251
        %vm259 = vcmp.lt.f32.partialorder %v258, 0.0004427343
        %v260 = vsel %vm259, %v257, %v254
        %v261 = vadd.f32 %v247, %v260
        %v262 = vsel %vm245, %v244, 0.0
        %v263 = vsub.f32 %v261, %v262
        %vm264 = vcmp.gt.f32.partialorder %v244, 0.0
        %vm265 = vmxor %vm264, 1
        %vm266 = vmand %vm245, %vm265
        %v267 = vsel %vm266, 1.0, 0.0
        %vm268 = vmand %vm246, %vm264
        %v269 = vsel %vm268, 1.0, 0.0
        %v270 = vmul.f32 %v267, 2.0
        %v271 = vadd.f32 %v270, 1.0
        %v272 = vmul.f32 %v269, 2.0
        %v273 = vadd.f32 %v271, %v272
        %v274 = vlaneseq
        %v275 = vshrl.u32 %v274, 7
        %v276 = vlaneseq
        %v277 = vand.u32 %v276, 127
        %s278 = smul.u32 %s234, 8
        %v279 = vstv %s278
        %v280 = vadd.s32 %v279, %v275
        %v281 = vmul.u32 %v280, 128
        %v282 = vadd.s32 %v281, %v277
        %vm283 = vcmp.lt.s32.totalorder %v282, 256
        %v284 = vsel %vm283, %v273, 0.0
        %v285 = vmul.f32 %v263, %v284
        %v286 = vadd.f32 %v285, 0.0
        %v287 = vld [vmem:[%s231] sm:$0xff]
        %v288 = vadd.f32 %v287, %v286
        %289 = vst [vmem:[%s231] sm:$0xff] %v288
        %s290 = sand.u32 %s111, 1
        %s291 = scalar_lea.sflag [#allocation4], %s290
        %s292 = sand.u32 %s111, 1
        %s293 = smul.addr %s292, 8
        %s294 = scalar_lea.vmem [#allocation7], %s293
        // Predicated region
        $region41: #{tpu_custom_call.1} parent=27 // pred_check
          %p295 = pneg %p121
        $region42: #{tpu_custom_call.1} parent=27 // pred_check_branch
          %297 = sbr.rel (%p295) target = $region44
        $region43: #{tpu_custom_call.1} parent=27 // pred_region
          %s299 = ssub.s32 128, 128
          %300 = vsyncadd %s291, %s299
          %s301 = sadd.s32 %s28, %s27
          %s302 = smul.addr %s301, 128
          %s303 = scalar_lea.hbm %s2, %s302
          %s305 = sshll.u32 %s294, 4
          %s306 = int_to_ptr.vmem [resolvable:$true] %s305
          %308 = dma.vmem_to_hbm [thread:$0]  %s306, 128, %s303, %s291
        $region44: #{tpu_custom_call.1} parent=27 // pred_fallthru
          _
      $region28: #{tpu_custom_call.1} parent=5 // pred_fallthru
        _
      %p309 = scmp.le.s32.totalorder 2, %s17
      // Predicated region
      $region45: #{tpu_custom_call.1} parent=5 // pred_check
        %p310 = pneg %p309
      $region46: #{tpu_custom_call.1} parent=5 // pred_check_branch
        %312 = sbr.rel (%p310) target = $region48
      $region47: #{tpu_custom_call.1} parent=5 // pred_region
        %s313 = ssub.s32 %s17, 2
        // Predicated region
        $region49: #{tpu_custom_call.1} parent=47 // pred_check
          %p314 = pneg %p127
        $region50: #{tpu_custom_call.1} parent=47 // pred_check_branch
          %316 = sbr.rel (%p314) target = $region52
        $region51: #{tpu_custom_call.1} parent=47 // pred_region
          %s317 = sand.u32 %s112, 1
          %s318 = scalar_lea.sflag [#allocation4], %s317
          %s319 = sand.u32 %s112, 1
          %s320 = smul.addr %s319, 8
          %s321 = scalar_lea.vmem [#allocation7], %s320
          %322 = dma.done %s318, 128
        $region52: #{tpu_custom_call.1} parent=47 // pred_fallthru
          _
      $region48: #{tpu_custom_call.1} parent=5 // pred_fallthru
        _
    $region6: #{tpu_custom_call.1} parent=1 // loop_footer
      %s21 = sadd.s32 1, %s17
    $region7: #{tpu_custom_call.1} parent=1 // loop_footer_branch
      %16 = sbr.rel target = $region3
    $region8: #{tpu_custom_call.1} parent=1 // loop_exit
      _
    %323 = vsyncpa [#allocation3], 1
    %s324 = scalar_lea.sflag [#allocation3], 1
    %325 = vsyncpa %s324, 1
    %326 = vsyncpa [#allocation6], 1
    %s327 = scalar_lea.sflag [#allocation6], 1
    %328 = vsyncpa %s327, 1
    %329 = vsyncpa [#allocation4], 1
    %s330 = scalar_lea.sflag [#allocation4], 1
    %331 = vsyncpa %s330, 1

</llo_original>
